<compile_context>
chip_gen: v7x
topology: tpu7x:2x2x1
jax: 0.10.0
libtpu: 0.0.40
codegen_flags: <defaults>
</compile_context>

<pallas_src>
import functools
import math

import jax
import jax.numpy as jnp
from jax.experimental import pallas as pl
from jax.experimental.pallas import tpu as pltpu


def _round_up(x, m):
    return (x + m - 1) // m * m


def _mha_map_kernel(q_ref, k_ref, wq_ref, bq_ref, wk_ref, bk_ref, o_ref,
                    logit_ref, *, num_heads, head_dim, bblk, nq, hw, hw_pad,
                    approx_recip):
    # q_ref    : [bblk*nq, C]            (compute dtype; norm_fact folded into wq/bq)
    # k_ref    : [bblk, C, HW]           (native NCHW channels, flattened spatial)
    # wq_ref   : [C, hidden]             (pre-transposed + pre-scaled)
    # bq_ref   : [1, hidden]  f32        (pre-scaled)
    # wk_ref   : [hidden, C]             (native nn.Linear layout -> no transpose)
    # bk_ref   : [hidden, 1]  f32
    # o_ref    : [bblk*nq, num_heads*HW] out dtype (bf16 or f32)
    # logit_ref: [bblk*nq, num_heads*HW_pad] f32 VMEM scratch (lane-padded slots)
    cdt = q_ref.dtype

    # ---- q projection for all bblk*nq rows at once; f32 accumulation. ----
    qp = jnp.dot(q_ref[...], wq_ref[...], preferred_element_type=jnp.float32)
    qp = qp + bq_ref[...]                          # [bblk*nq, hidden] f32
    qp_c = qp.astype(cdt)                          # single hoisted whole-tile cast

    wk = wk_ref[...]
    bk = bk_ref[...]                               # [hidden, 1] f32

    for bi in range(bblk):
        # 1x1 conv == pointwise linear over channels:
        #   [hidden, C] @ [C, HW] -> [hidden, HW]   (no transpose of k needed)
        kp = jnp.dot(wk, k_ref[bi], preferred_element_type=jnp.float32) + bk
        kp_c = kp.astype(cdt)                      # single hoisted per-batch cast
        r0 = bi * nq
        for n in range(num_heads):
            lo = n * head_dim
            qn = qp_c[r0:r0 + nq, lo:lo + head_dim]     # [nq, hd]
            kn = kp_c[lo:lo + head_dim, :]              # [hd, HW]
            # Head slot starts at a multiple of 128 lanes in the f32 scratch.
            logit_ref[r0:r0 + nq, n * hw_pad:n * hw_pad + hw] = jnp.dot(
                qn, kn, preferred_element_type=jnp.float32)

    # ---- softmax jointly over (num_heads * HW) per row, in f32, in VMEM. ----
    logits = logit_ref[...]
    if hw_pad != hw:
        # Kill the pad lanes of each head slot (uninitialized scratch) with -inf.
        lane = jax.lax.broadcasted_iota(jnp.int32, (1, num_heads * hw_pad), 1)
        valid = (lane % hw_pad) < hw
        logits = jnp.where(valid, logits, -jnp.inf)
    m = jnp.max(logits, axis=-1, keepdims=True)
    e = jnp.exp(logits - m)
    s = jnp.sum(e, axis=-1, keepdims=True)
    probs = e * pl.reciprocal(s, approx=approx_recip)

    # Single compact cast-on-store pass to the (bf16/f32) output block.
    if hw_pad == hw:
        o_ref[...] = probs.astype(o_ref.dtype)
    else:
        for n in range(num_heads):
            o_ref[:, n * hw:(n + 1) * hw] = probs[
                :, n * hw_pad:n * hw_pad + hw].astype(o_ref.dtype)
    # TODO(synk): optional `mask` masked_fill(-inf) path not implemented (mask=None).


def mh_attention_map(q, k, wq, bq, wk, bk, num_heads, *,
                     block_b=1,
                     compute_dtype=jnp.bfloat16,
                     out_dtype=jnp.bfloat16,
                     vmem_limit_bytes=64 * 1024 * 1024):
    """q: [t, b, nq, C]; k: [t, b, C, h, w] (PyTorch layout).

    Returns [t*b, nq, num_heads, h, w] (same as the PyTorch module).
    compute_dtype: MXU operand dtype for q/k/weights (accumulation stays f32).
    out_dtype:     dtype of the stored attention map (softmax math stays f32).
    """
    t, b, nq, C = q.shape
    _, _, Ck, h, w = k.shape
    assert Ck == C
    hidden = wq.shape[0]
    assert hidden % num_heads == 0
    head_dim = hidden // num_heads
    norm_fact = float(hidden / num_heads) ** (-0.5)
    B = t * b
    HW = h * w
    assert B % block_b == 0, "block_b must divide t*b"

    # Pad nq to a sublane multiple (8): keeps q/out blocks on clean (8,128)
    # tiles and per-batch row offsets sublane-aligned (DETR nq=100 -> 104).
    nq_pad = _round_up(nq, 8)
    # 128-lane-padded per-head slot width in the f32 logits scratch.
    HW_pad = _round_up(HW, 128)
    Mblk = block_b * nq_pad

    # q as a 2D [B*nq_pad, C] slab (pad rows are zeros, stripped after).
    q3 = q.reshape(B, nq, C)
    if nq_pad != nq:
        q3 = jnp.pad(q3, ((0, 0), (0, nq_pad - nq), (0, 0)))
    q2 = q3.reshape(B * nq_pad, C).astype(compute_dtype)
    # k kept in its NATIVE [B, C, HW] layout -> no HBM transpose pass.
    k2 = k.reshape(B, C, HW).astype(compute_dtype)
    # Fold norm_fact into the q projection at trace time; weights in compute
    # dtype, biases stay f32 (added post-accumulation).
    wq_t = (wq.T * norm_fact).astype(compute_dtype)          # [C, hidden]
    wk_m = wk.astype(compute_dtype)                          # [hidden, C] (native)
    bq2 = (bq * norm_fact).reshape(1, hidden).astype(jnp.float32)
    bk2 = bk.reshape(hidden, 1).astype(jnp.float32)

    approx_recip = bool(jnp.dtype(compute_dtype) != jnp.dtype(jnp.float32))

    kernel = functools.partial(
        _mha_map_kernel, num_heads=num_heads, head_dim=head_dim,
        bblk=block_b, nq=nq_pad, hw=HW, hw_pad=HW_pad,
        approx_recip=approx_recip)

    out = pl.pallas_call(
        kernel,
        out_shape=jax.ShapeDtypeStruct((B * nq_pad, num_heads * HW), out_dtype),
        grid_spec=pltpu.PrefetchScalarGridSpec(
            num_scalar_prefetch=0,
            grid=(B // block_b,),
            in_specs=[
                pl.BlockSpec((Mblk, C), lambda i: (i, 0)),
                pl.BlockSpec((block_b, C, HW), lambda i: (i, 0, 0)),
                # Weight/bias blocks have constant index_maps (fetched once /
                # reused across the batch grid; not re-DMA'd per step).
                pl.BlockSpec((C, hidden), lambda i: (0, 0)),
                pl.BlockSpec((1, hidden), lambda i: (0, 0)),
                pl.BlockSpec((hidden, C), lambda i: (0, 0)),
                pl.BlockSpec((hidden, 1), lambda i: (0, 0)),
            ],
            out_specs=pl.BlockSpec((Mblk, num_heads * HW), lambda i: (i, 0)),
            scratch_shapes=[
                # Lane-padded f32 logits / softmax workspace.
                pltpu.VMEM((Mblk, num_heads * HW_pad), jnp.float32),
            ],
        ),
        compiler_params=pltpu.CompilerParams(
            dimension_semantics=("parallel",),
            vmem_limit_bytes=vmem_limit_bytes),
    )(q2, k2, wq_t, bq2, wk_m, bk2)

    out = out.reshape(B, nq_pad, num_heads, h, w)
    if nq_pad != nq:
        out = out[:, :nq]
    return out


def _reference(q, k, wq, bq, wk, bk, num_heads):
    """Pure-JAX reference mirroring the PyTorch forward exactly."""
    t, b, nq, C = q.shape
    _, _, _, h, w = k.shape
    hidden = wq.shape[0]
    hd = hidden // num_heads
    norm = float(hidden / num_heads) ** (-0.5)
    B = t * b
    q2 = q.reshape(B, nq, C) @ wq.T + bq                     # [B, nq, hidden]
    k2 = jnp.einsum('bchw,oc->bohw', k.reshape(B, C, h, w), wk) \
        + bk[None, :, None, None]
    qh = q2.reshape(B, nq, num_heads, hd)
    kh = k2.reshape(B, num_heads, hd, h, w)
    wts = jnp.einsum('bqnc,bnchw->bqnhw', qh * norm, kh)
    flat = wts.reshape(B, nq, -1)
    flat = jax.nn.softmax(flat, axis=-1)
    return flat.reshape(B, nq, num_heads, h, w)


if __name__ == "__main__":
    # Small shapes consistent with the module.
    t, b, nq = 1, 2, 8
    query_dim = 16
    hidden_dim = 32
    num_heads = 4
    h = w = 8

    key = jax.random.PRNGKey(0)
    kq, kk, kwq, kwk = jax.random.split(key, 4)

    q = jax.random.normal(kq, (t, b, nq, query_dim), dtype=jnp.float32)
    k = jax.random.normal(kk, (t, b, query_dim, h, w), dtype=jnp.float32)

    # Deterministic parameter init (xavier_uniform weights, zero biases),
    # matching nn.Linear(query_dim, hidden_dim): weight [hidden, query_dim].
    bound = math.sqrt(6.0 / (query_dim + hidden_dim))
    wq = jax.random.uniform(kwq, (hidden_dim, query_dim), jnp.float32, -bound, bound)
    wk = jax.random.uniform(kwk, (hidden_dim, query_dim), jnp.float32, -bound, bound)
    bq = jnp.zeros((hidden_dim,), jnp.float32)
    bk = jnp.zeros((hidden_dim,), jnp.float32)

    ref = _reference(q, k, wq, bq, wk, bk, num_heads)

    # 1) f32-exact path (exact reciprocal, f32 output), one batch per grid step.
    out = mh_attention_map(q, k, wq, bq, wk, bk, num_heads, block_b=1,
                           compute_dtype=jnp.float32, out_dtype=jnp.float32)
    out = jax.block_until_ready(out)
    assert out.shape == (t * b, nq, num_heads, h, w)
    assert jnp.allclose(out, ref, rtol=1e-5, atol=1e-5), "f32 mismatch vs reference"

    # 2) performance defaults: bf16 MXU operands + bf16 output, batch-blocked
    #    (accumulation, bias adds and the whole softmax stay f32).
    out_bf16 = mh_attention_map(q, k, wq, bq, wk, bk, num_heads, block_b=2)
    out_bf16 = jax.block_until_ready(out_bf16)
    assert out_bf16.shape == (t * b, nq, num_heads, h, w)
    assert jnp.allclose(out_bf16.astype(jnp.float32), ref,
                        rtol=5e-2, atol=5e-2), "bf16 mismatch vs reference"

    # 3) nq not a multiple of 8 exercises the sublane-padding path (DETR nq=100 case).
    nq_odd = 6
    q_odd = q[:, :, :nq_odd]
    ref_odd = _reference(q_odd, k, wq, bq, wk, bk, num_heads)
    out_odd = mh_attention_map(q_odd, k, wq, bq, wk, bk, num_heads, block_b=1,
                               compute_dtype=jnp.float32, out_dtype=jnp.float32)
    out_odd = jax.block_until_ready(out_odd)
    assert out_odd.shape == (t * b, nq_odd, num_heads, h, w)
    assert jnp.allclose(out_odd, ref_odd, rtol=1e-5, atol=1e-5), "nq-pad mismatch"

    print("KERNEL_OK")
</pallas_src>

<mosaic_0001>
module attributes {stable_mosaic.version = 11 : i64} {
  func.func @_mha_map_kernel(%arg0: i32, %arg1: memref<8x16xf32, #tpu.memory_space<vmem>>, %arg2: memref<1x16x64xf32, #tpu.memory_space<vmem>>, %arg3: memref<16x32xf32, #tpu.memory_space<vmem>>, %arg4: memref<1x32xf32, #tpu.memory_space<vmem>>, %arg5: memref<32x16xf32, #tpu.memory_space<vmem>>, %arg6: memref<32x1xf32, #tpu.memory_space<vmem>>, %arg7: memref<8x256xf32, #tpu.memory_space<vmem>>, %arg8: memref<8x512xf32, #tpu.memory_space<vmem>>) attributes {dimension_semantics = [#tpu.dimension_semantics<parallel>], iteration_bounds = array<i64: 2>, scalar_prefetch = 0 : i64, scratch_operands = 1 : i64, tpu.core_type = #tpu.core_type<tc>, window_params = [{transform_indices = @transform_0, window_bounds = array<i64: 8, 16>}, {transform_indices = @transform_1, window_bounds = array<i64: 1, 16, 64>}, {pipeline_mode = #tpu.pipeline_mode<synchronous>, transform_indices = @transform_2, window_bounds = array<i64: 16, 32>}, {pipeline_mode = #tpu.pipeline_mode<synchronous>, transform_indices = @transform_3, window_bounds = array<i64: 1, 32>}, {pipeline_mode = #tpu.pipeline_mode<synchronous>, transform_indices = @transform_4, window_bounds = array<i64: 32, 16>}, {pipeline_mode = #tpu.pipeline_mode<synchronous>, transform_indices = @transform_5, window_bounds = array<i64: 32, 1>}, {transform_indices = @transform_6, window_bounds = array<i64: 8, 256>}]} {
    %c0 = arith.constant 0 : index
    %c0_0 = arith.constant 0 : index
    %0 = vector.load %arg1[%c0, %c0_0] : memref<8x16xf32, #tpu.memory_space<vmem>>, vector<8x16xf32>
    %c0_1 = arith.constant 0 : index
    %c0_2 = arith.constant 0 : index
    %1 = vector.load %arg3[%c0_1, %c0_2] : memref<16x32xf32, #tpu.memory_space<vmem>>, vector<16x32xf32>
    %cst = arith.constant dense<0.000000e+00> : vector<8x32xf32>
    %2 = tpu.matmul %0, %1, %cst {dimension_numbers = #tpu.dot_dimension_numbers<[1], [0], [0], [1], [0, 0, 1, 1], [], []>} : vector<8x16xf32>, vector<16x32xf32>, vector<8x32xf32> -> vector<8x32xf32>
    %c0_3 = arith.constant 0 : index
    %c0_4 = arith.constant 0 : index
    %3 = vector.load %arg4[%c0_3, %c0_4] : memref<1x32xf32, #tpu.memory_space<vmem>>, vector<1x32xf32>
    %4 = vector.broadcast %3 : vector<1x32xf32> to vector<8x32xf32>
    %5 = arith.addf %2, %4 : vector<8x32xf32>
    %c0_5 = arith.constant 0 : index
    %c0_6 = arith.constant 0 : index
    %6 = vector.load %arg5[%c0_5, %c0_6] : memref<32x16xf32, #tpu.memory_space<vmem>>, vector<32x16xf32>
    %c0_7 = arith.constant 0 : index
    %c0_8 = arith.constant 0 : index
    %7 = vector.load %arg6[%c0_7, %c0_8] : memref<32x1xf32, #tpu.memory_space<vmem>>, vector<32x1xf32>
    %c0_9 = arith.constant 0 : index
    %c0_10 = arith.constant 0 : index
    %c0_11 = arith.constant 0 : index
    %8 = vector.load %arg2[%c0_9, %c0_10, %c0_11] : memref<1x16x64xf32, #tpu.memory_space<vmem>>, vector<1x16x64xf32>
    %9 = vector.shape_cast %8 : vector<1x16x64xf32> to vector<16x64xf32>
    %cst_12 = arith.constant dense<0.000000e+00> : vector<32x64xf32>
    %10 = tpu.matmul %6, %9, %cst_12 {dimension_numbers = #tpu.dot_dimension_numbers<[1], [0], [0], [1], [0, 0, 1, 1], [], []>} : vector<32x16xf32>, vector<16x64xf32>, vector<32x64xf32> -> vector<32x64xf32>
    %11 = vector.broadcast %7 : vector<32x1xf32> to vector<32x64xf32>
    %12 = arith.addf %10, %11 : vector<32x64xf32>
    %13 = vector.extract_strided_slice %5 {offsets = [0, 0], sizes = [8, 8], strides = [1, 1]} : vector<8x32xf32> to vector<8x8xf32>
    %14 = vector.extract_strided_slice %12 {offsets = [0, 0], sizes = [8, 64], strides = [1, 1]} : vector<32x64xf32> to vector<8x64xf32>
    %cst_13 = arith.constant dense<0.000000e+00> : vector<8x64xf32>
    %15 = tpu.matmul %13, %14, %cst_13 {dimension_numbers = #tpu.dot_dimension_numbers<[1], [0], [0], [1], [0, 0, 1, 1], [], []>} : vector<8x8xf32>, vector<8x64xf32>, vector<8x64xf32> -> vector<8x64xf32>
    %c0_14 = arith.constant 0 : index
    %c0_15 = arith.constant 0 : index
    %16 = vector.load %arg8[%c0_14, %c0_15] : memref<8x512xf32, #tpu.memory_space<vmem>>, vector<8x64xf32>
    tpu.vector_store %arg8[%c0_14, %c0_15], %15 {strides = array<i32>} : memref<8x512xf32, #tpu.memory_space<vmem>>, vector<8x64xf32>,
    %17 = vector.extract_strided_slice %5 {offsets = [0, 8], sizes = [8, 8], strides = [1, 1]} : vector<8x32xf32> to vector<8x8xf32>
    %18 = vector.extract_strided_slice %12 {offsets = [8, 0], sizes = [8, 64], strides = [1, 1]} : vector<32x64xf32> to vector<8x64xf32>
    %cst_16 = arith.constant dense<0.000000e+00> : vector<8x64xf32>
    %19 = tpu.matmul %17, %18, %cst_16 {dimension_numbers = #tpu.dot_dimension_numbers<[1], [0], [0], [1], [0, 0, 1, 1], [], []>} : vector<8x8xf32>, vector<8x64xf32>, vector<8x64xf32> -> vector<8x64xf32>
    %c0_17 = arith.constant 0 : index
    %c128 = arith.constant 128 : index
    %20 = vector.load %arg8[%c0_17, %c128] : memref<8x512xf32, #tpu.memory_space<vmem>>, vector<8x64xf32>
    tpu.vector_store %arg8[%c0_17, %c128], %19 {strides = array<i32>} : memref<8x512xf32, #tpu.memory_space<vmem>>, vector<8x64xf32>,
    %21 = vector.extract_strided_slice %5 {offsets = [0, 16], sizes = [8, 8], strides = [1, 1]} : vector<8x32xf32> to vector<8x8xf32>
    %22 = vector.extract_strided_slice %12 {offsets = [16, 0], sizes = [8, 64], strides = [1, 1]} : vector<32x64xf32> to vector<8x64xf32>
    %cst_18 = arith.constant dense<0.000000e+00> : vector<8x64xf32>
    %23 = tpu.matmul %21, %22, %cst_18 {dimension_numbers = #tpu.dot_dimension_numbers<[1], [0], [0], [1], [0, 0, 1, 1], [], []>} : vector<8x8xf32>, vector<8x64xf32>, vector<8x64xf32> -> vector<8x64xf32>
    %c0_19 = arith.constant 0 : index
    %c256 = arith.constant 256 : index
    %24 = vector.load %arg8[%c0_19, %c256] : memref<8x512xf32, #tpu.memory_space<vmem>>, vector<8x64xf32>
    tpu.vector_store %arg8[%c0_19, %c256], %23 {strides = array<i32>} : memref<8x512xf32, #tpu.memory_space<vmem>>, vector<8x64xf32>,
    %25 = vector.extract_strided_slice %5 {offsets = [0, 24], sizes = [8, 8], strides = [1, 1]} : vector<8x32xf32> to vector<8x8xf32>
    %26 = vector.extract_strided_slice %12 {offsets = [24, 0], sizes = [8, 64], strides = [1, 1]} : vector<32x64xf32> to vector<8x64xf32>
    %cst_20 = arith.constant dense<0.000000e+00> : vector<8x64xf32>
    %27 = tpu.matmul %25, %26, %cst_20 {dimension_numbers = #tpu.dot_dimension_numbers<[1], [0], [0], [1], [0, 0, 1, 1], [], []>} : vector<8x8xf32>, vector<8x64xf32>, vector<8x64xf32> -> vector<8x64xf32>
    %c0_21 = arith.constant 0 : index
    %c384 = arith.constant 384 : index
    %28 = vector.load %arg8[%c0_21, %c384] : memref<8x512xf32, #tpu.memory_space<vmem>>, vector<8x64xf32>
    tpu.vector_store %arg8[%c0_21, %c384], %27 {strides = array<i32>} : memref<8x512xf32, #tpu.memory_space<vmem>>, vector<8x64xf32>,
    %c0_22 = arith.constant 0 : index
    %c0_23 = arith.constant 0 : index
    %29 = vector.load %arg8[%c0_22, %c0_23] : memref<8x512xf32, #tpu.memory_space<vmem>>, vector<8x512xf32>
    %30 = tpu.iota {dimensions = array<i32: 1>} : vector<1x512xi32>
    %c128_i32 = arith.constant 128 : i32
    %c0_i32 = arith.constant 0 : i32
    %31 = arith.cmpi eq, %c128_i32, %c0_i32 : i32
    %c1_i32 = arith.constant 1 : i32
    %32 = arith.select %31, %c1_i32, %c128_i32 : i32
    %33 = vector.broadcast %32 : i32 to vector<1x512xi32>
    %34 = arith.remsi %30, %33 : vector<1x512xi32>
    %c0_i32_24 = arith.constant 0 : i32
    %35 = vector.broadcast %c0_i32_24 : i32 to vector<1x512xi32>
    %36 = arith.cmpi ne, %34, %35 : vector<1x512xi32>
    %c0_i32_25 = arith.constant 0 : i32
    %37 = vector.broadcast %c0_i32_25 : i32 to vector<1x512xi32>
    %38 = arith.cmpi slt, %34, %37 : vector<1x512xi32>
    %c0_i32_26 = arith.constant 0 : i32
    %39 = arith.cmpi slt, %32, %c0_i32_26 : i32
    %40 = vector.broadcast %39 : i1 to vector<1x512xi1>
    %41 = vector.broadcast %40 : vector<1x512xi1> to vector<1x512xi1>
    %42 = arith.xori %38, %41 : vector<1x512xi1>
    %43 = arith.andi %42, %36 : vector<1x512xi1>
    %44 = vector.broadcast %32 : i32 to vector<1x512xi32>
    %45 = arith.addi %34, %44 : vector<1x512xi32>
    %46 = arith.select %43, %45, %34 : vector<1x512xi1>, vector<1x512xi32>
    %c64_i32 = arith.constant 64 : i32
    %47 = vector.broadcast %c64_i32 : i32 to vector<1x512xi32>
    %48 = arith.cmpi slt, %46, %47 : vector<1x512xi32>
    %cst_27 = arith.constant 0xFF800000 : f32
    %49 = vector.shape_cast %48 : vector<1x512xi1> to vector<1x512xi1>
    %50 = vector.broadcast %49 : vector<1x512xi1> to vector<8x512xi1>
    %51 = vector.broadcast %cst_27 : f32 to vector<8x512xf32>
    %52 = arith.select %50, %29, %51 : vector<8x512xi1>, vector<8x512xf32>
    %cst_28 = arith.constant dense<0xFF800000> : vector<8xf32>
    %53 = vector.multi_reduction <maximumf>, %52, %cst_28 [1] : vector<8x512xf32> to vector<8xf32>
    %54 = vector.shape_cast %53 : vector<8xf32> to vector<8x1xf32>
    %55 = vector.broadcast %54 : vector<8x1xf32> to vector<8x512xf32>
    %56 = arith.subf %52, %55 : vector<8x512xf32>
    %57 = math.exp %56 : vector<8x512xf32>
    %cst_29 = arith.constant dense<0.000000e+00> : vector<8xf32>
    %58 = vector.multi_reduction <add>, %57, %cst_29 [1] : vector<8x512xf32> to vector<8xf32>
    %59 = vector.shape_cast %58 : vector<8xf32> to vector<8x1xf32>
    %60 = tpu.reciprocal %59 : vector<8x1xf32> -> vector<8x1xf32>
    %61 = vector.broadcast %60 : vector<8x1xf32> to vector<8x512xf32>
    %62 = arith.mulf %57, %61 : vector<8x512xf32>
    %63 = vector.extract_strided_slice %62 {offsets = [0, 0], sizes = [8, 64], strides = [1, 1]} : vector<8x512xf32> to vector<8x64xf32>
    %c0_30 = arith.constant 0 : index
    %c0_31 = arith.constant 0 : index
    %64 = vector.load %arg7[%c0_30, %c0_31] : memref<8x256xf32, #tpu.memory_space<vmem>>, vector<8x64xf32>
    tpu.vector_store %arg7[%c0_30, %c0_31], %63 {strides = array<i32>} : memref<8x256xf32, #tpu.memory_space<vmem>>, vector<8x64xf32>,
    %65 = vector.extract_strided_slice %62 {offsets = [0, 128], sizes = [8, 64], strides = [1, 1]} : vector<8x512xf32> to vector<8x64xf32>
    %c0_32 = arith.constant 0 : index
    %c64 = arith.constant 64 : index
    %66 = vector.load %arg7[%c0_32, %c64] : memref<8x256xf32, #tpu.memory_space<vmem>>, vector<8x64xf32>
    tpu.vector_store %arg7[%c0_32, %c64], %65 {strides = array<i32>} : memref<8x256xf32, #tpu.memory_space<vmem>>, vector<8x64xf32>,
    %67 = vector.extract_strided_slice %62 {offsets = [0, 256], sizes = [8, 64], strides = [1, 1]} : vector<8x512xf32> to vector<8x64xf32>
    %c0_33 = arith.constant 0 : index
    %c128_34 = arith.constant 128 : index
    %68 = vector.load %arg7[%c0_33, %c128_34] : memref<8x256xf32, #tpu.memory_space<vmem>>, vector<8x64xf32>
    tpu.vector_store %arg7[%c0_33, %c128_34], %67 {strides = array<i32>} : memref<8x256xf32, #tpu.memory_space<vmem>>, vector<8x64xf32>,
    %69 = vector.extract_strided_slice %62 {offsets = [0, 384], sizes = [8, 64], strides = [1, 1]} : vector<8x512xf32> to vector<8x64xf32>
    %c0_35 = arith.constant 0 : index
    %c192 = arith.constant 192 : index
    %70 = vector.load %arg7[%c0_35, %c192] : memref<8x256xf32, #tpu.memory_space<vmem>>, vector<8x64xf32>
    tpu.vector_store %arg7[%c0_35, %c192], %69 {strides = array<i32>} : memref<8x256xf32, #tpu.memory_space<vmem>>, vector<8x64xf32>,
    return
  }
  func.func @transform_0(%arg0: i32) -> (i32, i32) {
    %c0_i32 = arith.constant 0 : i32
    %c0_i32_0 = arith.constant 0 : i32
    return %arg0, %c0_i32 : i32, i32
  }
  func.func @transform_1(%arg0: i32) -> (i32, i32, i32) {
    %c0_i32 = arith.constant 0 : i32
    %c0_i32_0 = arith.constant 0 : i32
    %c0_i32_1 = arith.constant 0 : i32
    return %arg0, %c0_i32, %c0_i32_0 : i32, i32, i32
  }
  func.func @transform_2(%arg0: i32) -> (i32, i32) {
    %c0_i32 = arith.constant 0 : i32
    %c0_i32_0 = arith.constant 0 : i32
    %c0_i32_1 = arith.constant 0 : i32
    return %c0_i32, %c0_i32_0 : i32, i32
  }
  func.func @transform_3(%arg0: i32) -> (i32, i32) {
    %c0_i32 = arith.constant 0 : i32
    %c0_i32_0 = arith.constant 0 : i32
    %c0_i32_1 = arith.constant 0 : i32
    return %c0_i32, %c0_i32_0 : i32, i32
  }
  func.func @transform_4(%arg0: i32) -> (i32, i32) {
    %c0_i32 = arith.constant 0 : i32
    %c0_i32_0 = arith.constant 0 : i32
    %c0_i32_1 = arith.constant 0 : i32
    return %c0_i32, %c0_i32_0 : i32, i32
  }
  func.func @transform_5(%arg0: i32) -> (i32, i32) {
    %c0_i32 = arith.constant 0 : i32
    %c0_i32_0 = arith.constant 0 : i32
    %c0_i32_1 = arith.constant 0 : i32
    return %c0_i32, %c0_i32_0 : i32, i32
  }
  func.func @transform_6(%arg0: i32) -> (i32, i32) {
    %c0_i32 = arith.constant 0 : i32
    %c0_i32_0 = arith.constant 0 : i32
    return %arg0, %c0_i32 : i32, i32
  }
}

</mosaic_0001>

<llo_original>
// kernel: tpu_custom_call.1
$region0: #{tpu_custom_call.1}
  #allocation0 [shape = 'u32[]', space=smem, size = 0x4, offset = 0x4, fixed_abs, tag = 'smem constant byte address 0x4 - core index']
  #allocation1 [shape = 'u32[144,128]{1,0:T(1,128)}', space=vmem, size = 0x12000, scoped, tag = 'internal scratch']
  #allocation2 [shape = 'f32[8,512]{1,0:T(8,128)}', space=vmem, size = 0x4000, scoped, tag = 'scratch operand']
  %s0 = inlined_call_operand.hbm [shape: f32[16,16], index: 0, kind: input, shape index: {}]
  %s1 = inlined_call_operand.hbm [shape: f32[2,16,64], index: 1, kind: input, shape index: {}]
  %s2 = inlined_call_operand.hbm [shape: f32[16,32], index: 2, kind: input, shape index: {}]
  %s3 = inlined_call_operand.hbm [shape: f32[1,32], index: 3, kind: input, shape index: {}]
  %s4 = inlined_call_operand.hbm [shape: f32[32,16], index: 4, kind: input, shape index: {}]
  %s5 = inlined_call_operand.hbm [shape: f32[32,1], index: 5, kind: input, shape index: {}]
  %s6 = inlined_call_operand.hbm [shape: f32[16,256], index: 6, kind: output, shape index: {}]
  %s7 = sld [smem:[#allocation0]]
  $region81: #{tpu_custom_call.1} parent=0
    _
  %s9 = ssub.s32 1, %s7
  %s10 = scalar_select 0, %s9, %s7
  $region1: #{tpu_custom_call.1} parent=0
    #allocation3 [shape = 'u8[8192]{0}', space=vmem, size = 0x2000, scoped, tag = 'input window, operand 0']
    #allocation4 [shape = 's32[2]{0}', space=sflag, size = 0x8, scoped, tag = 'scoped memory for tpu_custom_call.1']
    #allocation5 [shape = 's32[2]{0}', space=sflag, size = 0x8, scoped, tag = 'scoped memory for tpu_custom_call.1']
    #allocation6 [shape = 'u8[16384]{0}', space=vmem, size = 0x4000, scoped, tag = 'input window, operand 1']
    #allocation7 [shape = 's32[2]{0}', space=sflag, size = 0x8, scoped, tag = 'scoped memory for tpu_custom_call.1']
    #allocation8 [shape = 'u8[8192]{0}', space=vmem, size = 0x2000, scoped, tag = 'input window, operand 2, single buffered']
    #allocation9 [shape = 'u8[512]{0}', space=vmem, size = 0x400, scoped, tag = 'input window, operand 3, single buffered']
    #allocation10 [shape = 's32[1]{0}', space=sflag, size = 0x4, scoped, tag = 'scoped memory for tpu_custom_call.1']
    #allocation11 [shape = 'u8[16384]{0}', space=vmem, size = 0x4000, scoped, tag = 'input window, operand 4, single buffered']
    #allocation12 [shape = 'u8[16384]{0}', space=vmem, size = 0x4000, scoped, tag = 'input window, operand 5, single buffered']
    #allocation13 [shape = 's32[1]{0}', space=sflag, size = 0x4, scoped, tag = 'scoped memory for tpu_custom_call.1']
    #allocation14 [shape = 'u8[16384]{0}', space=vmem, size = 0x4000, scoped, tag = 'output window, operand 0']
    %11 = vsyncpa [#allocation4], 0
    %s12 = scalar_lea.sflag [#allocation4], 1
    %13 = vsyncpa %s12, 0
    %14 = vsyncpa [#allocation7], 0
    %s15 = scalar_lea.sflag [#allocation7], 1
    %16 = vsyncpa %s15, 0
    %17 = vsyncpa [#allocation10], 0
    %18 = vsyncpa [#allocation13], 0
    %19 = vsyncpa [#allocation5], 0
    %s20 = scalar_lea.sflag [#allocation5], 1
    %21 = vsyncpa %s20, 0
    loop: start=0, step=1, limit=4
    $region2: #{tpu_custom_call.1} parent=1 // loop_pre_header
      _
    $region3: #{tpu_custom_call.1} parent=1 // loop_header
      %s23 = sphi 0, %s27
      %p24 = scmp.ge.s32.totalorder %s23, 4
      %s33 = sphi 0, %s35
      %s36 = sphi 0, %s33
      %s37 = sphi 0, %s36
      %s53 = sphi 0, %s37
      %s59 = sphi 0, %s61
      %s62 = sphi 0, %s59
      %s63 = sphi 0, %s62
      %s79 = sphi 0, %s63
      %s83 = sphi 0, %s83
      %s85 = sphi 0, %s83
      %s86 = sphi 0, %s85
      %s100 = sphi 0, %s86
      %s104 = sphi 0, %s104
      %s106 = sphi 0, %s104
      %s107 = sphi 0, %s106
      %s121 = sphi 0, %s107
      %s125 = sphi 0, %s125
      %s127 = sphi 0, %s125
      %s128 = sphi 0, %s127
      %s142 = sphi 0, %s128
      %s146 = sphi 0, %s146
      %s148 = sphi 0, %s146
      %s149 = sphi 0, %s148
      %s163 = sphi 0, %s149
      %s169 = sphi 0, %s171
      %s172 = sphi 0, %s169
      %s173 = sphi 0, %s172
      %s189 = sphi 0, %s173
    $region4: #{tpu_custom_call.1} parent=1 // loop_header_branch
      %26 = sbr.rel (%p24) target = $region8
    $region5: #{tpu_custom_call.1} parent=1 // loop_body
      %s28 = ssub.s32 %s23, 1
      %s29 = ssub.s32 %s23, 2
      %s30 = sadd.s32 %s23, 1
      %s31 = ssub.s32 %s23, %s30
      %p32 = scmp.eq.s32.totalorder %s31, 0
      %s34 = sadd.s32 %s33, 1
      %s35 = scalar_select %p32, %s33, %s34
      %p38 = pneg %p32
      %p39 = scmp.eq.s32.totalorder %s23, 1
      %p40 = por %p38, %p39
      %p41 = scmp.ne.s32.totalorder %s33, %s36
      %p42 = scmp.eq.s32.totalorder %s23, 0
      %p43 = por %p41, %p42
      %p44 = scmp.ne.s32.totalorder %s33, %s36
      %p45 = scmp.eq.s32.totalorder %s28, 1
      %p46 = por %p44, %p45
      %p47 = scmp.ne.s32.totalorder %s36, %s37
      %p48 = scmp.eq.s32.totalorder %s28, 0
      %p49 = por %p47, %p48
      %p50 = scmp.ne.s32.totalorder %s36, %s37
      %p51 = scmp.eq.s32.totalorder %s29, 1
      %p52 = por %p50, %p51
      %p54 = scmp.ne.s32.totalorder %s37, %s53
      %p55 = scmp.eq.s32.totalorder %s29, 0
      %p56 = por %p54, %p55
      %s57 = ssub.s32 %s23, %s30
      %p58 = scmp.eq.s32.totalorder %s57, 0
      %s60 = sadd.s32 %s59, 1
      %s61 = scalar_select %p58, %s59, %s60
      %p64 = pneg %p58
      %p65 = scmp.eq.s32.totalorder %s23, 1
      %p66 = por %p64, %p65
      %p67 = scmp.ne.s32.totalorder %s59, %s62
      %p68 = scmp.eq.s32.totalorder %s23, 0
      %p69 = por %p67, %p68
      %p70 = scmp.ne.s32.totalorder %s59, %s62
      %p71 = scmp.eq.s32.totalorder %s28, 1
      %p72 = por %p70, %p71
      %p73 = scmp.ne.s32.totalorder %s62, %s63
      %p74 = scmp.eq.s32.totalorder %s28, 0
      %p75 = por %p73, %p74
      %p76 = scmp.ne.s32.totalorder %s62, %s63
      %p77 = scmp.eq.s32.totalorder %s29, 1
      %p78 = por %p76, %p77
      %p80 = scmp.ne.s32.totalorder %s63, %s79
      %p81 = scmp.eq.s32.totalorder %s29, 0
      %p82 = por %p80, %p81
      %s84 = sadd.s32 %s83, 1
      %p87 = scmp.eq.s32.totalorder %s23, 1
      %p88 = scmp.ne.s32.totalorder %s83, %s85
      %p89 = scmp.eq.s32.totalorder %s23, 0
      %p90 = por %p88, %p89
      %p91 = scmp.ne.s32.totalorder %s83, %s85
      %p92 = scmp.eq.s32.totalorder %s28, 1
      %p93 = por %p91, %p92
      %p94 = scmp.ne.s32.totalorder %s85, %s86
      %p95 = scmp.eq.s32.totalorder %s28, 0
      %p96 = por %p94, %p95
      %p97 = scmp.ne.s32.totalorder %s85, %s86
      %p98 = scmp.eq.s32.totalorder %s29, 1
      %p99 = por %p97, %p98
      %p101 = scmp.ne.s32.totalorder %s86, %s100
      %p102 = scmp.eq.s32.totalorder %s29, 0
      %p103 = por %p101, %p102
      %s105 = sadd.s32 %s104, 1
      %p108 = scmp.eq.s32.totalorder %s23, 1
      %p109 = scmp.ne.s32.totalorder %s104, %s106
      %p110 = scmp.eq.s32.totalorder %s23, 0
      %p111 = por %p109, %p110
      %p112 = scmp.ne.s32.totalorder %s104, %s106
      %p113 = scmp.eq.s32.totalorder %s28, 1
      %p114 = por %p112, %p113
      %p115 = scmp.ne.s32.totalorder %s106, %s107
      %p116 = scmp.eq.s32.totalorder %s28, 0
      %p117 = por %p115, %p116
      %p118 = scmp.ne.s32.totalorder %s106, %s107
      %p119 = scmp.eq.s32.totalorder %s29, 1
      %p120 = por %p118, %p119
      %p122 = scmp.ne.s32.totalorder %s107, %s121
      %p123 = scmp.eq.s32.totalorder %s29, 0
      %p124 = por %p122, %p123
      %s126 = sadd.s32 %s125, 1
      %p129 = scmp.eq.s32.totalorder %s23, 1
      %p130 = scmp.ne.s32.totalorder %s125, %s127
      %p131 = scmp.eq.s32.totalorder %s23, 0
      %p132 = por %p130, %p131
      %p133 = scmp.ne.s32.totalorder %s125, %s127
      %p134 = scmp.eq.s32.totalorder %s28, 1
      %p135 = por %p133, %p134
      %p136 = scmp.ne.s32.totalorder %s127, %s128
      %p137 = scmp.eq.s32.totalorder %s28, 0
      %p138 = por %p136, %p137
      %p139 = scmp.ne.s32.totalorder %s127, %s128
      %p140 = scmp.eq.s32.totalorder %s29, 1
      %p141 = por %p139, %p140
      %p143 = scmp.ne.s32.totalorder %s128, %s142
      %p144 = scmp.eq.s32.totalorder %s29, 0
      %p145 = por %p143, %p144
      %s147 = sadd.s32 %s146, 1
      %p150 = scmp.eq.s32.totalorder %s23, 1
      %p151 = scmp.ne.s32.totalorder %s146, %s148
      %p152 = scmp.eq.s32.totalorder %s23, 0
      %p153 = por %p151, %p152
      %p154 = scmp.ne.s32.totalorder %s146, %s148
      %p155 = scmp.eq.s32.totalorder %s28, 1
      %p156 = por %p154, %p155
      %p157 = scmp.ne.s32.totalorder %s148, %s149
      %p158 = scmp.eq.s32.totalorder %s28, 0
      %p159 = por %p157, %p158
      %p160 = scmp.ne.s32.totalorder %s148, %s149
      %p161 = scmp.eq.s32.totalorder %s29, 1
      %p162 = por %p160, %p161
      %p164 = scmp.ne.s32.totalorder %s149, %s163
      %p165 = scmp.eq.s32.totalorder %s29, 0
      %p166 = por %p164, %p165
      %s167 = ssub.s32 %s23, %s30
      %p168 = scmp.eq.s32.totalorder %s167, 0
      %s170 = sadd.s32 %s169, 1
      %s171 = scalar_select %p168, %s169, %s170
      %p174 = pneg %p168
      %p175 = scmp.eq.s32.totalorder %s23, 1
      %p176 = por %p174, %p175
      %p177 = scmp.ne.s32.totalorder %s169, %s172
      %p178 = scmp.eq.s32.totalorder %s23, 0
      %p179 = por %p177, %p178
      %p180 = scmp.ne.s32.totalorder %s169, %s172
      %p181 = scmp.eq.s32.totalorder %s28, 1
      %p182 = por %p180, %p181
      %p183 = scmp.ne.s32.totalorder %s172, %s173
      %p184 = scmp.eq.s32.totalorder %s28, 0
      %p185 = por %p183, %p184
      %p186 = scmp.ne.s32.totalorder %s172, %s173
      %p187 = scmp.eq.s32.totalorder %s29, 1
      %p188 = por %p186, %p187
      %p190 = scmp.ne.s32.totalorder %s173, %s189
      %p191 = scmp.eq.s32.totalorder %s29, 0
      %p192 = por %p190, %p191
      %p193 = scmp.le.s32.totalorder 1, %s23
      %p194 = scmp.lt.s32.totalorder %s23, 3
      %p195 = pnand %p193, %p194
      %p196 = pneg %p195
      // Predicated region
      $region9: #{tpu_custom_call.1} parent=5 // pred_check
        _
      $region10: #{tpu_custom_call.1} parent=5 // pred_check_branch
        %198 = sbr.rel (%p195) target = $region12
      $region11: #{tpu_custom_call.1} parent=5 // pred_region
        %s199 = ssub.s32 %s23, 1
        // Predicated region
        $region13: #{tpu_custom_call.1} parent=11 // pred_check
          %p200 = pneg %p96
        $region14: #{tpu_custom_call.1} parent=11 // pred_check_branch
          %202 = sbr.rel (%p200) target = $region16
        $region15: #{tpu_custom_call.1} parent=11 // pred_region
          %s204 = ssub.s32 256, 256
          %205 = vsyncadd [#allocation7], %s204
          %s206 = sshll.u32 [#allocation8], 4
          %s207 = int_to_ptr.vmem [resolvable:$true] %s206
          %212 = dma.hbm_to_vmem [thread:$0]  %s2, 256, %s207, [#allocation7], 128, 128, 8
        $region16: #{tpu_custom_call.1} parent=11 // pred_fallthru
          _
        // Predicated region
        $region17: #{tpu_custom_call.1} parent=11 // pred_check
          %p213 = pneg %p117
        $region18: #{tpu_custom_call.1} parent=11 // pred_check_branch
          %215 = sbr.rel (%p213) target = $region20
        $region19: #{tpu_custom_call.1} parent=11 // pred_region
          %s217 = ssub.s32 16, 16
          %218 = vsyncadd [#allocation10], %s217
          %s220 = sshll.u32 [#allocation9], 4
          %s221 = int_to_ptr.vmem [resolvable:$true] %s220
          %223 = dma.hbm_to_vmem [thread:$0]  %s3, 16, %s221, [#allocation10]
        $region20: #{tpu_custom_call.1} parent=11 // pred_fallthru
          _
        // Predicated region
        $region21: #{tpu_custom_call.1} parent=11 // pred_check
          %p224 = pneg %p138
        $region22: #{tpu_custom_call.1} parent=11 // pred_check_branch
          %226 = sbr.rel (%p224) target = $region24
        $region23: #{tpu_custom_call.1} parent=11 // pred_region
          %s228 = ssub.s32 512, 512
          %229 = vsyncadd [#allocation10], %s228
          %s230 = sshll.u32 [#allocation11], 4
          %s231 = int_to_ptr.vmem [resolvable:$true] %s230
          %236 = dma.hbm_to_vmem [thread:$0]  %s4, 512, %s231, [#allocation10], 128, 128, 8
        $region24: #{tpu_custom_call.1} parent=11 // pred_fallthru
          _
        // Predicated region
        $region25: #{tpu_custom_call.1} parent=11 // pred_check
          %p237 = pneg %p159
        $region26: #{tpu_custom_call.1} parent=11 // pred_check_branch
          %239 = sbr.rel (%p237) target = $region28
        $region27: #{tpu_custom_call.1} parent=11 // pred_region
          %s241 = ssub.s32 512, 512
          %242 = vsyncadd [#allocation13], %s241
          %s243 = sshll.u32 [#allocation12], 4
          %s244 = int_to_ptr.vmem [resolvable:$true] %s243
          %249 = dma.hbm_to_vmem [thread:$0]  %s5, 512, %s244, [#allocation13], 128, 128, 8
        $region28: #{tpu_custom_call.1} parent=11 // pred_fallthru
          _
      $region12: #{tpu_custom_call.1} parent=5 // pred_fallthru
        _
      %p250 = scmp.lt.s32.totalorder %s23, 2
      // Predicated region
      $region29: #{tpu_custom_call.1} parent=5 // pred_check
        %p251 = pneg %p250
      $region30: #{tpu_custom_call.1} parent=5 // pred_check_branch
        %253 = sbr.rel (%p251) target = $region32
      $region31: #{tpu_custom_call.1} parent=5 // pred_region
        // Predicated region
        $region33: #{tpu_custom_call.1} parent=31 // pred_check
          %p254 = pneg %p43
        $region34: #{tpu_custom_call.1} parent=31 // pred_check_branch
          %256 = sbr.rel (%p254) target = $region36
        $region35: #{tpu_custom_call.1} parent=31 // pred_region
          %s257 = sand.u32 %s33, 1
          %s258 = scalar_lea.sflag [#allocation4], %s257
          %s259 = sand.u32 %s33, 1
          %s260 = smul.addr %s259, 8
          %s261 = scalar_lea.vmem [#allocation3], %s260
          %s263 = ssub.s32 128, 128
          %264 = vsyncadd %s258, %s263
          %s265 = smul.addr %s23, 128
          %s266 = scalar_lea.hbm %s0, %s265
          %s268 = sshll.u32 %s261, 4
          %s269 = int_to_ptr.vmem [resolvable:$true] %s268
          %271 = dma.hbm_to_vmem [thread:$0]  %s266, 128, %s269, %s258
        $region36: #{tpu_custom_call.1} parent=31 // pred_fallthru
          _
        // Predicated region
        $region37: #{tpu_custom_call.1} parent=31 // pred_check
          %p272 = pneg %p69
        $region38: #{tpu_custom_call.1} parent=31 // pred_check_branch
          %274 = sbr.rel (%p272) target = $region40
        $region39: #{tpu_custom_call.1} parent=31 // pred_region
          %s275 = sand.u32 %s23, 1
          %s276 = scalar_lea.sflag [#allocation7], %s275
          %s277 = sand.u32 %s59, 1
          %s278 = smul.addr %s277, 16
          %s279 = scalar_lea.vmem [#allocation6], %s278
          %s281 = ssub.s32 256, 256
          %282 = vsyncadd %s276, %s281
          %s283 = smul.addr %s23, 2
          %s284 = smul.addr %s283, 128
          %s285 = scalar_lea.hbm %s1, %s284
          %s286 = sshll.u32 %s279, 4
          %s287 = int_to_ptr.vmem [resolvable:$true] %s286
          %292 = dma.hbm_to_vmem [thread:$0]  %s285, 256, %s287, %s276, 128, 128, 8
        $region40: #{tpu_custom_call.1} parent=31 // pred_fallthru
          _
      $region32: #{tpu_custom_call.1} parent=5 // pred_fallthru
        _
      %p293 = scmp.le.s32.totalorder 1, %s23
      %p294 = scmp.lt.s32.totalorder %s23, 3
      %p295 = pnand %p293, %p294
      %p296 = pneg %p295
      // Predicated region
      $region41: #{tpu_custom_call.1} parent=5 // pred_check
        _
      $region42: #{tpu_custom_call.1} parent=5 // pred_check_branch
        %298 = sbr.rel (%p295) target = $region44
      $region43: #{tpu_custom_call.1} parent=5 // pred_region
        %s299 = ssub.s32 %s23, 1
        %s300 = sand.u32 %s36, 1
        %s301 = scalar_lea.sflag [#allocation4], %s300
        %s302 = sand.u32 %s36, 1
        %s303 = smul.addr %s302, 8
        %s304 = scalar_lea.vmem [#allocation3], %s303
        // Predicated region
        $region45: #{tpu_custom_call.1} parent=43 // pred_check
          %p305 = pneg %p49
        $region46: #{tpu_custom_call.1} parent=43 // pred_check_branch
          %307 = sbr.rel (%p305) target = $region48
        $region47: #{tpu_custom_call.1} parent=43 // pred_region
          %308 = dma.done %s301, 128
        $region48: #{tpu_custom_call.1} parent=43 // pred_fallthru
          _
        %s309 = sand.u32 %s28, 1
        %s310 = scalar_lea.sflag [#allocation7], %s309
        %s311 = sand.u32 %s62, 1
        %s312 = smul.addr %s311, 16
        %s313 = scalar_lea.vmem [#allocation6], %s312
        // Predicated region
        $region49: #{tpu_custom_call.1} parent=43 // pred_check
          %p314 = pneg %p75
        $region50: #{tpu_custom_call.1} parent=43 // pred_check_branch
          %316 = sbr.rel (%p314) target = $region52
        $region51: #{tpu_custom_call.1} parent=43 // pred_region
          %317 = dma.done %s310, 256
        $region52: #{tpu_custom_call.1} parent=43 // pred_fallthru
          _
        // Predicated region
        $region53: #{tpu_custom_call.1} parent=43 // pred_check
          %p318 = pneg %p96
        $region54: #{tpu_custom_call.1} parent=43 // pred_check_branch
          %320 = sbr.rel (%p318) target = $region56
        $region55: #{tpu_custom_call.1} parent=43 // pred_region
          %321 = dma.done [#allocation7], 256
        $region56: #{tpu_custom_call.1} parent=43 // pred_fallthru
          _
        // Predicated region
        $region57: #{tpu_custom_call.1} parent=43 // pred_check
          %p322 = pneg %p117
        $region58: #{tpu_custom_call.1} parent=43 // pred_check_branch
          %324 = sbr.rel (%p322) target = $region60
        $region59: #{tpu_custom_call.1} parent=43 // pred_region
          %325 = dma.done [#allocation10], 16
        $region60: #{tpu_custom_call.1} parent=43 // pred_fallthru
          _
        // Predicated region
        $region61: #{tpu_custom_call.1} parent=43 // pred_check
          %p326 = pneg %p138
        $region62: #{tpu_custom_call.1} parent=43 // pred_check_branch
          %328 = sbr.rel (%p326) target = $region64
        $region63: #{tpu_custom_call.1} parent=43 // pred_region
          %329 = dma.done [#allocation10], 512
        $region64: #{tpu_custom_call.1} parent=43 // pred_fallthru
          _
        // Predicated region
        $region65: #{tpu_custom_call.1} parent=43 // pred_check
          %p330 = pneg %p159
        $region66: #{tpu_custom_call.1} parent=43 // pred_check_branch
          %332 = sbr.rel (%p330) target = $region68
        $region67: #{tpu_custom_call.1} parent=43 // pred_region
          %333 = dma.done [#allocation13], 512
        $region68: #{tpu_custom_call.1} parent=43 // pred_fallthru
          _
        %s334 = sand.u32 %s36, 1
        %s335 = scalar_lea.sflag [#allocation4], %s334
        %s336 = sand.u32 %s36, 1
        %s337 = smul.addr %s336, 8
        %s338 = scalar_lea.vmem [#allocation3], %s337
        %p339 = pneg %p49
        %p340 = pneg %p46
        %s341 = sand.u32 %s28, 1
        %s342 = scalar_lea.sflag [#allocation7], %s341
        %s343 = sand.u32 %s62, 1
        %s344 = smul.addr %s343, 16
        %s345 = scalar_lea.vmem [#allocation6], %s344
        %p346 = pneg %p75
        %p347 = pneg %p72
        %p348 = pneg %p96
        %p349 = pneg %p93
        %p350 = pneg %p117
        %p351 = pneg %p114
        %p352 = pneg %p138
        %p353 = pneg %p135
        %p354 = pneg %p159
        %p355 = pneg %p156
        %p356 = pneg %p185
        %p357 = pneg %p182
        %s358 = sand.u32 %s172, 1
        %s359 = scalar_lea.sflag [#allocation5], %s358
        %s360 = sand.u32 %s172, 1
        %s361 = smul.addr %s360, 16
        %s362 = scalar_lea.vmem [#allocation14], %s361
        %v363 = vld [vmem:[%s304] sm:$0xff]
        %v364 = vld [vmem:[#allocation8] sm:$0xff]
        %v365 = vld [vmem:[#allocation8 + $0x8] sm:$0xff]
        %v366 = vld [vmem:[#allocation9] sm:$0x1]
        %v368 = vlaneseq
        %v369 = vshrl.u32 %v368, 7
        %v370 = vsub.s32 0, %v369
        %v371 = vrot.slane %v366, %v370
        %vm373 = vcmask 130048
        %v375 = vsel %vm373, %v363, 0
        %377 = vmatprep.subr.mxu0 0.0
        %378 = vmatpush1.msra.mxu0 %v364
        %379 = vmatprep.subr.mxu0 0.0
        %380 = vmatpush1.msra.mxu0 %v365
        %381 = vmatprep.subr.mxu0 0.0
        %382 = vmatpush1.msra.mxu0 0.0
        %383 = vmatprep.subr.mxu0 0.0
        %384 = vmatpush1.msra.mxu0 0.0
        %385 = vmatprep.subr.mxu0 0.0
        %386 = vmatpush1.msra.mxu0 0.0
        %387 = vmatprep.subr.mxu0 0.0
        %388 = vmatpush1.msra.mxu0 0.0
        %389 = vmatprep.subr.mxu0 0.0
        %390 = vmatpush1.msra.mxu0 0.0
        %391 = vmatprep.subr.mxu0 0.0
        %392 = vmatpush1.msra.mxu0 0.0
        %393 = vmatprep.subr.mxu0 0.0
        %394 = vmatpush1.msra.mxu0 0.0
        %395 = vmatprep.subr.mxu0 0.0
        %396 = vmatpush1.msra.mxu0 0.0
        %397 = vmatprep.subr.mxu0 0.0
        %398 = vmatpush1.msra.mxu0 0.0
        %399 = vmatprep.subr.mxu0 0.0
        %400 = vmatpush1.msra.mxu0 0.0
        %401 = vmatprep.subr.mxu0 0.0
        %402 = vmatpush1.msra.mxu0 0.0
        %403 = vmatprep.subr.mxu0 0.0
        %404 = vmatpush1.msra.mxu0 0.0
        %405 = vmatprep.subr.mxu0 0.0
        %406 = vmatpush1.msra.mxu0 0.0
        %407 = vmatprep.subr.mxu0 0.0
        %408 = vmatpush1.msra.mxu0 0.0
        %409 = vmatprep.subr.mxu0 0.0
        %410 = vmatpush1.msra.mxu0 0.0
        %411 = vmatprep.subr.mxu0 0.0
        %412 = vmatpush1.msra.mxu0 0.0
        %413 = vmatprep.subr.mxu0 0.0
        %414 = vmatpush1.msra.mxu0 0.0
        %415 = vmatprep.subr.mxu0 0.0
        %416 = vmatpush1.msra.mxu0 0.0
        %417 = vmatprep.subr.mxu0 0.0
        %418 = vmatpush1.msra.mxu0 0.0
        %419 = vmatprep.subr.mxu0 0.0
        %420 = vmatpush1.msra.mxu0 0.0
        %421 = vmatprep.subr.mxu0 0.0
        %422 = vmatpush1.msra.mxu0 0.0
        %423 = vmatprep.subr.mxu0 0.0
        %424 = vmatpush1.msra.mxu0 0.0
        %425 = vmatprep.subr.mxu0 0.0
        %426 = vmatpush1.msra.mxu0 0.0
        %427 = vmatprep.subr.mxu0 0.0
        %428 = vmatpush1.msra.mxu0 0.0
        %429 = vmatprep.subr.mxu0 0.0
        %430 = vmatpush1.msra.mxu0 0.0
        %431 = vmatprep.subr.mxu0 0.0
        %432 = vmatpush1.msra.mxu0 0.0
        %433 = vmatprep.subr.mxu0 0.0
        %434 = vmatpush1.msra.mxu0 0.0
        %435 = vmatprep.subr.mxu0 0.0
        %436 = vmatpush1.msra.mxu0 0.0
        %437 = vmatprep.subr.mxu0 0.0
        %438 = vmatpush1.msra.mxu0 0.0
        %439 = vmatprep.subr.mxu0 0.0
        %440 = vmatpush1.msra.mxu0 0.0
        %441 = vmatprep.mubr.f32.mxu0 0.0
        %442 = vmatmul.mubr.f32.gmra.mrb[0].mxu0 %v375
        %v443 = vpop.f32.mrb[0].mxu0
        %v444 = vadd.f32 %v371, %v443
        %v445 = vpop.f32.mrb[0].mxu0
        %446 = vdwg.mxu0
        %v447 = vld [vmem:[#allocation11] sm:$0xff]
        %v448 = vld [vmem:[#allocation11 + $0x8] sm:$0xff]
        %v449 = vld [vmem:[#allocation11 + $0x10] sm:$0xff]
        %v450 = vld [vmem:[#allocation11 + $0x18] sm:$0xff]
        %v451 = vld [vmem:[#allocation12] sm:$0xff]
        %v452 = vld [vmem:[#allocation12 + $0x8] sm:$0xff]
        %v453 = vld [vmem:[#allocation12 + $0x10] sm:$0xff]
        %v454 = vld [vmem:[#allocation12 + $0x18] sm:$0xff]
        %v455 = vld [vmem:[%s313] sm:$0xff]
        %v456 = vld [vmem:[%s313 + $0x8] sm:$0xff]
        %458 = vset.pattern.permute.xlu0 0
        %459 = vperm.xlu0 %458, %v451
        %v460 = vpop.permute.xlu0 %459
        %463 = vset.pattern.permute.xlu0 0
        %464 = vperm.xlu0 %463, %v452
        %v465 = vpop.permute.xlu0 %464
        %468 = vset.pattern.permute.xlu0 0
        %469 = vperm.xlu0 %468, %v453
        %v470 = vpop.permute.xlu0 %469
        %473 = vset.pattern.permute.xlu0 0
        %474 = vperm.xlu0 %473, %v454
        %v475 = vpop.permute.xlu0 %474
        %v478 = vsel %vm373, %v447, 0
        %v481 = vsel %vm373, %v448, 0
        %v484 = vsel %vm373, %v449, 0
        %v487 = vsel %vm373, %v450, 0
        %489 = vmatprep.subr.mxu0 0.0
        %490 = vmatpush1.msra.mxu0 %v455
        %491 = vmatprep.subr.mxu0 0.0
        %492 = vmatpush1.msra.mxu0 %v456
        %493 = vmatprep.subr.mxu0 0.0
        %494 = vmatpush1.msra.mxu0 0.0
        %495 = vmatprep.subr.mxu0 0.0
        %496 = vmatpush1.msra.mxu0 0.0
        %497 = vmatprep.subr.mxu0 0.0
        %498 = vmatpush1.msra.mxu0 0.0
        %499 = vmatprep.subr.mxu0 0.0
        %500 = vmatpush1.msra.mxu0 0.0
        %501 = vmatprep.subr.mxu0 0.0
        %502 = vmatpush1.msra.mxu0 0.0
        %503 = vmatprep.subr.mxu0 0.0
        %504 = vmatpush1.msra.mxu0 0.0
        %505 = vmatprep.subr.mxu0 0.0
        %506 = vmatpush1.msra.mxu0 0.0
        %507 = vmatprep.subr.mxu0 0.0
        %508 = vmatpush1.msra.mxu0 0.0
        %509 = vmatprep.subr.mxu0 0.0
        %510 = vmatpush1.msra.mxu0 0.0
        %511 = vmatprep.subr.mxu0 0.0
        %512 = vmatpush1.msra.mxu0 0.0
        %513 = vmatprep.subr.mxu0 0.0
        %514 = vmatpush1.msra.mxu0 0.0
        %515 = vmatprep.subr.mxu0 0.0
        %516 = vmatpush1.msra.mxu0 0.0
        %517 = vmatprep.subr.mxu0 0.0
        %518 = vmatpush1.msra.mxu0 0.0
        %519 = vmatprep.subr.mxu0 0.0
        %520 = vmatpush1.msra.mxu0 0.0
        %521 = vmatprep.subr.mxu0 0.0
        %522 = vmatpush1.msra.mxu0 0.0
        %523 = vmatprep.subr.mxu0 0.0
        %524 = vmatpush1.msra.mxu0 0.0
        %525 = vmatprep.subr.mxu0 0.0
        %526 = vmatpush1.msra.mxu0 0.0
        %527 = vmatprep.subr.mxu0 0.0
        %528 = vmatpush1.msra.mxu0 0.0
        %529 = vmatprep.subr.mxu0 0.0
        %530 = vmatpush1.msra.mxu0 0.0
        %531 = vmatprep.subr.mxu0 0.0
        %532 = vmatpush1.msra.mxu0 0.0
        %533 = vmatprep.subr.mxu0 0.0
        %534 = vmatpush1.msra.mxu0 0.0
        %535 = vmatprep.subr.mxu0 0.0
        %536 = vmatpush1.msra.mxu0 0.0
        %537 = vmatprep.subr.mxu0 0.0
        %538 = vmatpush1.msra.mxu0 0.0
        %539 = vmatprep.subr.mxu0 0.0
        %540 = vmatpush1.msra.mxu0 0.0
        %541 = vmatprep.subr.mxu0 0.0
        %542 = vmatpush1.msra.mxu0 0.0
        %543 = vmatprep.subr.mxu0 0.0
        %544 = vmatpush1.msra.mxu0 0.0
        %545 = vmatprep.subr.mxu0 0.0
        %546 = vmatpush1.msra.mxu0 0.0
        %547 = vmatprep.subr.mxu0 0.0
        %548 = vmatpush1.msra.mxu0 0.0
        %549 = vmatprep.subr.mxu0 0.0
        %550 = vmatpush1.msra.mxu0 0.0
        %551 = vmatprep.subr.mxu0 0.0
        %552 = vmatpush1.msra.mxu0 0.0
        %553 = vmatprep.mubr.f32.mxu0 0.0
        %554 = vmatmul.mubr.f32.gmra.mrb[0].mxu0 %v478
        %v555 = vpop.f32.mrb[0].mxu0
        %v556 = vadd.f32 %v460, %v555
        %v557 = vpop.f32.mrb[0].mxu0
        %558 = vmatprep.mubr.f32.mxu0 0.0
        %559 = vmatmul.mubr.f32.gmra.mrb[0].mxu0 %v481
        %v560 = vpop.f32.mrb[0].mxu0
        %v561 = vadd.f32 %v465, %v560
        %v562 = vpop.f32.mrb[0].mxu0
        %563 = vmatprep.mubr.f32.mxu0 0.0
        %564 = vmatmul.mubr.f32.gmra.mrb[0].mxu0 %v484
        %v565 = vpop.f32.mrb[0].mxu0
        %v566 = vadd.f32 %v470, %v565
        %v567 = vpop.f32.mrb[0].mxu0
        %568 = vmatprep.mubr.f32.mxu0 0.0
        %569 = vmatmul.mubr.f32.gmra.mrb[0].mxu0 %v487
        %v570 = vpop.f32.mrb[0].mxu0
        %v571 = vadd.f32 %v475, %v570
        %v572 = vpop.f32.mrb[0].mxu0
        %573 = vdwg.mxu0
        %vm574 = vcmask 64512
        %v576 = vsel %vm574, %v444, 0
        %578 = vmatprep.subr.mxu0 0.0
        %579 = vmatpush1.msra.mxu0 %v556
        %580 = vmatprep.subr.mxu0 0.0
        %581 = vmatpush1.msra.mxu0 0.0
        %582 = vmatprep.subr.mxu0 0.0
        %583 = vmatpush1.msra.mxu0 0.0
        %584 = vmatprep.subr.mxu0 0.0
        %585 = vmatpush1.msra.mxu0 0.0
        %586 = vmatprep.subr.mxu0 0.0
        %587 = vmatpush1.msra.mxu0 0.0
        %588 = vmatprep.subr.mxu0 0.0
        %589 = vmatpush1.msra.mxu0 0.0
        %590 = vmatprep.subr.mxu0 0.0
        %591 = vmatpush1.msra.mxu0 0.0
        %592 = vmatprep.subr.mxu0 0.0
        %593 = vmatpush1.msra.mxu0 0.0
        %594 = vmatprep.subr.mxu0 0.0
        %595 = vmatpush1.msra.mxu0 0.0
        %596 = vmatprep.subr.mxu0 0.0
        %597 = vmatpush1.msra.mxu0 0.0
        %598 = vmatprep.subr.mxu0 0.0
        %599 = vmatpush1.msra.mxu0 0.0
        %600 = vmatprep.subr.mxu0 0.0
        %601 = vmatpush1.msra.mxu0 0.0
        %602 = vmatprep.subr.mxu0 0.0
        %603 = vmatpush1.msra.mxu0 0.0
        %604 = vmatprep.subr.mxu0 0.0
        %605 = vmatpush1.msra.mxu0 0.0
        %606 = vmatprep.subr.mxu0 0.0
        %607 = vmatpush1.msra.mxu0 0.0
        %608 = vmatprep.subr.mxu0 0.0
        %609 = vmatpush1.msra.mxu0 0.0
        %610 = vmatprep.subr.mxu0 0.0
        %611 = vmatpush1.msra.mxu0 0.0
        %612 = vmatprep.subr.mxu0 0.0
        %613 = vmatpush1.msra.mxu0 0.0
        %614 = vmatprep.subr.mxu0 0.0
        %615 = vmatpush1.msra.mxu0 0.0
        %616 = vmatprep.subr.mxu0 0.0
        %617 = vmatpush1.msra.mxu0 0.0
        %618 = vmatprep.subr.mxu0 0.0
        %619 = vmatpush1.msra.mxu0 0.0
        %620 = vmatprep.subr.mxu0 0.0
        %621 = vmatpush1.msra.mxu0 0.0
        %622 = vmatprep.subr.mxu0 0.0
        %623 = vmatpush1.msra.mxu0 0.0
        %624 = vmatprep.subr.mxu0 0.0
        %625 = vmatpush1.msra.mxu0 0.0
        %626 = vmatprep.subr.mxu0 0.0
        %627 = vmatpush1.msra.mxu0 0.0
        %628 = vmatprep.subr.mxu0 0.0
        %629 = vmatpush1.msra.mxu0 0.0
        %630 = vmatprep.subr.mxu0 0.0
        %631 = vmatpush1.msra.mxu0 0.0
        %632 = vmatprep.subr.mxu0 0.0
        %633 = vmatpush1.msra.mxu0 0.0
        %634 = vmatprep.subr.mxu0 0.0
        %635 = vmatpush1.msra.mxu0 0.0
        %636 = vmatprep.subr.mxu0 0.0
        %637 = vmatpush1.msra.mxu0 0.0
        %638 = vmatprep.subr.mxu0 0.0
        %639 = vmatpush1.msra.mxu0 0.0
        %640 = vmatprep.subr.mxu0 0.0
        %641 = vmatpush1.msra.mxu0 0.0
        %642 = vmatprep.mubr.f32.mxu0 0.0
        %643 = vmatmul.mubr.f32.gmra.mrb[0].mxu0 %v576
        %v644 = vpop.f32.mrb[0].mxu0
        %v645 = vadd.f32 0.0, %v644
        %v646 = vpop.f32.mrb[0].mxu0
        %647 = vdwg.mxu0
        %vm648 = vcmask 523264
        %649 = vst.msk [vmem:[#allocation2] sm:$0xff] %vm648, %v645
        %650 = vrot.lane.b32.xlu0 %v444, 120
        %v651 = vpop.permute.xlu0 %650
        %v652 = vsel %vm574, %v651, 0
        %654 = vmatprep.subr.mxu0 0.0
        %655 = vmatpush1.msra.mxu0 %v561
        %656 = vmatprep.subr.mxu0 0.0
        %657 = vmatpush1.msra.mxu0 0.0
        %658 = vmatprep.subr.mxu0 0.0
        %659 = vmatpush1.msra.mxu0 0.0
        %660 = vmatprep.subr.mxu0 0.0
        %661 = vmatpush1.msra.mxu0 0.0
        %662 = vmatprep.subr.mxu0 0.0
        %663 = vmatpush1.msra.mxu0 0.0
        %664 = vmatprep.subr.mxu0 0.0
        %665 = vmatpush1.msra.mxu0 0.0
        %666 = vmatprep.subr.mxu0 0.0
        %667 = vmatpush1.msra.mxu0 0.0
        %668 = vmatprep.subr.mxu0 0.0
        %669 = vmatpush1.msra.mxu0 0.0
        %670 = vmatprep.subr.mxu0 0.0
        %671 = vmatpush1.msra.mxu0 0.0
        %672 = vmatprep.subr.mxu0 0.0
        %673 = vmatpush1.msra.mxu0 0.0
        %674 = vmatprep.subr.mxu0 0.0
        %675 = vmatpush1.msra.mxu0 0.0
        %676 = vmatprep.subr.mxu0 0.0
        %677 = vmatpush1.msra.mxu0 0.0
        %678 = vmatprep.subr.mxu0 0.0
        %679 = vmatpush1.msra.mxu0 0.0
        %680 = vmatprep.subr.mxu0 0.0
        %681 = vmatpush1.msra.mxu0 0.0
        %682 = vmatprep.subr.mxu0 0.0
        %683 = vmatpush1.msra.mxu0 0.0
        %684 = vmatprep.subr.mxu0 0.0
        %685 = vmatpush1.msra.mxu0 0.0
        %686 = vmatprep.subr.mxu0 0.0
        %687 = vmatpush1.msra.mxu0 0.0
        %688 = vmatprep.subr.mxu0 0.0
        %689 = vmatpush1.msra.mxu0 0.0
        %690 = vmatprep.subr.mxu0 0.0
        %691 = vmatpush1.msra.mxu0 0.0
        %692 = vmatprep.subr.mxu0 0.0
        %693 = vmatpush1.msra.mxu0 0.0
        %694 = vmatprep.subr.mxu0 0.0
        %695 = vmatpush1.msra.mxu0 0.0
        %696 = vmatprep.subr.mxu0 0.0
        %697 = vmatpush1.msra.mxu0 0.0
        %698 = vmatprep.subr.mxu0 0.0
        %699 = vmatpush1.msra.mxu0 0.0
        %700 = vmatprep.subr.mxu0 0.0
        %701 = vmatpush1.msra.mxu0 0.0
        %702 = vmatprep.subr.mxu0 0.0
        %703 = vmatpush1.msra.mxu0 0.0
        %704 = vmatprep.subr.mxu0 0.0
        %705 = vmatpush1.msra.mxu0 0.0
        %706 = vmatprep.subr.mxu0 0.0
        %707 = vmatpush1.msra.mxu0 0.0
        %708 = vmatprep.subr.mxu0 0.0
        %709 = vmatpush1.msra.mxu0 0.0
        %710 = vmatprep.subr.mxu0 0.0
        %711 = vmatpush1.msra.mxu0 0.0
        %712 = vmatprep.subr.mxu0 0.0
        %713 = vmatpush1.msra.mxu0 0.0
        %714 = vmatprep.subr.mxu0 0.0
        %715 = vmatpush1.msra.mxu0 0.0
        %716 = vmatprep.subr.mxu0 0.0
        %717 = vmatpush1.msra.mxu0 0.0
        %718 = vmatprep.mubr.f32.mxu0 0.0
        %719 = vmatmul.mubr.f32.gmra.mrb[0].mxu0 %v652
        %v720 = vpop.f32.mrb[0].mxu0
        %v721 = vadd.f32 0.0, %v720
        %v722 = vpop.f32.mrb[0].mxu0
        %723 = vdwg.mxu0
        %724 = vst.msk [vmem:[#allocation2 + $0x8] sm:$0xff] %vm648, %v721
        %725 = vrot.lane.b32.xlu0 %v444, 112
        %v726 = vpop.permute.xlu0 %725
        %v727 = vsel %vm574, %v726, 0
        %729 = vmatprep.subr.mxu0 0.0
        %730 = vmatpush1.msra.mxu0 %v566
        %731 = vmatprep.subr.mxu0 0.0
        %732 = vmatpush1.msra.mxu0 0.0
        %733 = vmatprep.subr.mxu0 0.0
        %734 = vmatpush1.msra.mxu0 0.0
        %735 = vmatprep.subr.mxu0 0.0
        %736 = vmatpush1.msra.mxu0 0.0
        %737 = vmatprep.subr.mxu0 0.0
        %738 = vmatpush1.msra.mxu0 0.0
        %739 = vmatprep.subr.mxu0 0.0
        %740 = vmatpush1.msra.mxu0 0.0
        %741 = vmatprep.subr.mxu0 0.0
        %742 = vmatpush1.msra.mxu0 0.0
        %743 = vmatprep.subr.mxu0 0.0
        %744 = vmatpush1.msra.mxu0 0.0
        %745 = vmatprep.subr.mxu0 0.0
        %746 = vmatpush1.msra.mxu0 0.0
        %747 = vmatprep.subr.mxu0 0.0
        %748 = vmatpush1.msra.mxu0 0.0
        %749 = vmatprep.subr.mxu0 0.0
        %750 = vmatpush1.msra.mxu0 0.0
        %751 = vmatprep.subr.mxu0 0.0
        %752 = vmatpush1.msra.mxu0 0.0
        %753 = vmatprep.subr.mxu0 0.0
        %754 = vmatpush1.msra.mxu0 0.0
        %755 = vmatprep.subr.mxu0 0.0
        %756 = vmatpush1.msra.mxu0 0.0
        %757 = vmatprep.subr.mxu0 0.0
        %758 = vmatpush1.msra.mxu0 0.0
        %759 = vmatprep.subr.mxu0 0.0
        %760 = vmatpush1.msra.mxu0 0.0
        %761 = vmatprep.subr.mxu0 0.0
        %762 = vmatpush1.msra.mxu0 0.0
        %763 = vmatprep.subr.mxu0 0.0
        %764 = vmatpush1.msra.mxu0 0.0
        %765 = vmatprep.subr.mxu0 0.0
        %766 = vmatpush1.msra.mxu0 0.0
        %767 = vmatprep.subr.mxu0 0.0
        %768 = vmatpush1.msra.mxu0 0.0
        %769 = vmatprep.subr.mxu0 0.0
        %770 = vmatpush1.msra.mxu0 0.0
        %771 = vmatprep.subr.mxu0 0.0
        %772 = vmatpush1.msra.mxu0 0.0
        %773 = vmatprep.subr.mxu0 0.0
        %774 = vmatpush1.msra.mxu0 0.0
        %775 = vmatprep.subr.mxu0 0.0
        %776 = vmatpush1.msra.mxu0 0.0
        %777 = vmatprep.subr.mxu0 0.0
        %778 = vmatpush1.msra.mxu0 0.0
        %779 = vmatprep.subr.mxu0 0.0
        %780 = vmatpush1.msra.mxu0 0.0
        %781 = vmatprep.subr.mxu0 0.0
        %782 = vmatpush1.msra.mxu0 0.0
        %783 = vmatprep.subr.mxu0 0.0
        %784 = vmatpush1.msra.mxu0 0.0
        %785 = vmatprep.subr.mxu0 0.0
        %786 = vmatpush1.msra.mxu0 0.0
        %787 = vmatprep.subr.mxu0 0.0
        %788 = vmatpush1.msra.mxu0 0.0
        %789 = vmatprep.subr.mxu0 0.0
        %790 = vmatpush1.msra.mxu0 0.0
        %791 = vmatprep.subr.mxu0 0.0
        %792 = vmatpush1.msra.mxu0 0.0
        %793 = vmatprep.mubr.f32.mxu0 0.0
        %794 = vmatmul.mubr.f32.gmra.mrb[0].mxu0 %v727
        %v795 = vpop.f32.mrb[0].mxu0
        %v796 = vadd.f32 0.0, %v795
        %v797 = vpop.f32.mrb[0].mxu0
        %798 = vdwg.mxu0
        %799 = vst.msk [vmem:[#allocation2 + $0x10] sm:$0xff] %vm648, %v796
        %800 = vrot.lane.b32.xlu0 %v444, 104
        %v801 = vpop.permute.xlu0 %800
        %v802 = vsel %vm574, %v801, 0
        %804 = vmatprep.subr.mxu0 0.0
        %805 = vmatpush1.msra.mxu0 %v571
        %806 = vmatprep.subr.mxu0 0.0
        %807 = vmatpush1.msra.mxu0 0.0
        %808 = vmatprep.subr.mxu0 0.0
        %809 = vmatpush1.msra.mxu0 0.0
        %810 = vmatprep.subr.mxu0 0.0
        %811 = vmatpush1.msra.mxu0 0.0
        %812 = vmatprep.subr.mxu0 0.0
        %813 = vmatpush1.msra.mxu0 0.0
        %814 = vmatprep.subr.mxu0 0.0
        %815 = vmatpush1.msra.mxu0 0.0
        %816 = vmatprep.subr.mxu0 0.0
        %817 = vmatpush1.msra.mxu0 0.0
        %818 = vmatprep.subr.mxu0 0.0
        %819 = vmatpush1.msra.mxu0 0.0
        %820 = vmatprep.subr.mxu0 0.0
        %821 = vmatpush1.msra.mxu0 0.0
        %822 = vmatprep.subr.mxu0 0.0
        %823 = vmatpush1.msra.mxu0 0.0
        %824 = vmatprep.subr.mxu0 0.0
        %825 = vmatpush1.msra.mxu0 0.0
        %826 = vmatprep.subr.mxu0 0.0
        %827 = vmatpush1.msra.mxu0 0.0
        %828 = vmatprep.subr.mxu0 0.0
        %829 = vmatpush1.msra.mxu0 0.0
        %830 = vmatprep.subr.mxu0 0.0
        %831 = vmatpush1.msra.mxu0 0.0
        %832 = vmatprep.subr.mxu0 0.0
        %833 = vmatpush1.msra.mxu0 0.0
        %834 = vmatprep.subr.mxu0 0.0
        %835 = vmatpush1.msra.mxu0 0.0
        %836 = vmatprep.subr.mxu0 0.0
        %837 = vmatpush1.msra.mxu0 0.0
        %838 = vmatprep.subr.mxu0 0.0
        %839 = vmatpush1.msra.mxu0 0.0
        %840 = vmatprep.subr.mxu0 0.0
        %841 = vmatpush1.msra.mxu0 0.0
        %842 = vmatprep.subr.mxu0 0.0
        %843 = vmatpush1.msra.mxu0 0.0
        %844 = vmatprep.subr.mxu0 0.0
        %845 = vmatpush1.msra.mxu0 0.0
        %846 = vmatprep.subr.mxu0 0.0
        %847 = vmatpush1.msra.mxu0 0.0
        %848 = vmatprep.subr.mxu0 0.0
        %849 = vmatpush1.msra.mxu0 0.0
        %850 = vmatprep.subr.mxu0 0.0
        %851 = vmatpush1.msra.mxu0 0.0
        %852 = vmatprep.subr.mxu0 0.0
        %853 = vmatpush1.msra.mxu0 0.0
        %854 = vmatprep.subr.mxu0 0.0
        %855 = vmatpush1.msra.mxu0 0.0
        %856 = vmatprep.subr.mxu0 0.0
        %857 = vmatpush1.msra.mxu0 0.0
        %858 = vmatprep.subr.mxu0 0.0
        %859 = vmatpush1.msra.mxu0 0.0
        %860 = vmatprep.subr.mxu0 0.0
        %861 = vmatpush1.msra.mxu0 0.0
        %862 = vmatprep.subr.mxu0 0.0
        %863 = vmatpush1.msra.mxu0 0.0
        %864 = vmatprep.subr.mxu0 0.0
        %865 = vmatpush1.msra.mxu0 0.0
        %866 = vmatprep.subr.mxu0 0.0
        %867 = vmatpush1.msra.mxu0 0.0
        %868 = vmatprep.mubr.f32.mxu0 0.0
        %869 = vmatmul.mubr.f32.gmra.mrb[0].mxu0 %v802
        %v870 = vpop.f32.mrb[0].mxu0
        %v871 = vadd.f32 0.0, %v870
        %v872 = vpop.f32.mrb[0].mxu0
        %873 = vdwg.mxu0
        %874 = vst.msk [vmem:[#allocation2 + $0x18] sm:$0xff] %vm648, %v871
        %v875 = vld [vmem:[#allocation2] sm:$0xff]
        %v876 = vld [vmem:[#allocation2 + $0x8] sm:$0xff]
        %v877 = vld [vmem:[#allocation2 + $0x10] sm:$0xff]
        %v878 = vld [vmem:[#allocation2 + $0x18] sm:$0xff]
        %v879 = vlaneseq
        %v880 = vand.u32 %v879, 127
        %v881 = vadd.s32 %v880, 128
        %v882 = vadd.s32 %v880, 256
        %v883 = vadd.s32 %v880, 384
        %vm884 = vcmp.lt.s32.totalorder %v880, 0
        %v885 = vsub.s32 0, %v880
        %v886 = vsel %vm884, %v885, %v880
        %v887 = vshrl.u32 %v886, 7
        %v888 = vand.u32 %v886, 127
        %v889 = vsub.s32 0, %v888
        %v890 = vsel %vm884, %v889, %v888
        %vm891 = vcmp.lt.s32.totalorder %v881, 0
        %v892 = vsub.s32 0, %v881
        %v893 = vsel %vm891, %v892, %v881
        %v894 = vshrl.u32 %v893, 7
        %v895 = vand.u32 %v893, 127
        %v896 = vsub.s32 0, %v895
        %v897 = vsel %vm891, %v896, %v895
        %vm898 = vcmp.lt.s32.totalorder %v882, 0
        %v899 = vsub.s32 0, %v882
        %v900 = vsel %vm898, %v899, %v882
        %v901 = vshrl.u32 %v900, 7
        %v902 = vand.u32 %v900, 127
        %v903 = vsub.s32 0, %v902
        %v904 = vsel %vm898, %v903, %v902
        %vm905 = vcmp.lt.s32.totalorder %v883, 0
        %v906 = vsub.s32 0, %v883
        %v907 = vsel %vm905, %v906, %v883
        %v908 = vshrl.u32 %v907, 7
        %v909 = vand.u32 %v907, 127
        %v910 = vsub.s32 0, %v909
        %v911 = vsel %vm905, %v910, %v909
        %vm912 = vcmp.ne.s32.totalorder %v890, 0
        %vm913 = vcmp.ne.s32.totalorder %v897, 0
        %vm914 = vcmp.ne.s32.totalorder %v904, 0
        %vm915 = vcmp.ne.s32.totalorder %v911, 0
        %vm916 = vcmp.lt.s32.totalorder %v890, 0
        %vm917 = vcmp.lt.s32.totalorder %v897, 0
        %vm918 = vcmp.lt.s32.totalorder %v904, 0
        %vm919 = vcmp.lt.s32.totalorder %v911, 0
        %vm920 = vmand %vm916, %vm912
        %vm921 = vmand %vm917, %vm913
        %vm922 = vmand %vm918, %vm914
        %vm923 = vmand %vm919, %vm915
        %v924 = vadd.s32 %v890, 128
        %v925 = vadd.s32 %v897, 128
        %v926 = vadd.s32 %v904, 128
        %v927 = vadd.s32 %v911, 128
        %v928 = vsel %vm920, %v924, %v890
        %v929 = vsel %vm921, %v925, %v897
        %v930 = vsel %vm922, %v926, %v904
        %v931 = vsel %vm923, %v927, %v911
        %vm932 = vcmp.lt.s32.totalorder %v928, 64
        %vm933 = vcmp.lt.s32.totalorder %v929, 64
        %vm934 = vcmp.lt.s32.totalorder %v930, 64
        %vm935 = vcmp.lt.s32.totalorder %v931, 64
        %v936 = vsel %vm932, 1, 0
        %v937 = vsel %vm933, 1, 0
        %v938 = vsel %vm934, 1, 0
        %v939 = vsel %vm935, 1, 0
        %vm940 = vcmp.eq.s32.totalorder %v936, 1
        %vm941 = vcmp.eq.s32.totalorder %v937, 1
        %vm942 = vcmp.eq.s32.totalorder %v938, 1
        %vm943 = vcmp.eq.s32.totalorder %v939, 1
        %v944 = vsel %vm940, %v875, -inf
        %v945 = vsel %vm941, %v876, -inf
        %v946 = vsel %vm942, %v877, -inf
        %v947 = vsel %vm943, %v878, -inf
        %v948 = vmax.f32 %v944, %v945
        %v949 = vmax.f32 %v946, %v947
        %v950 = vmax.f32 %v948, %v949
        %951 = vmax.xlane.f32.xlu0 %v950
        %v952 = vpop.xlane.xlu0 %951
        %v953 = vsub.f32 %v944, %v952
        %v954 = vsub.f32 %v945, %v952
        %v955 = vsub.f32 %v946, %v952
        %v956 = vsub.f32 %v947, %v952
        %v957 = vmul.f32 %v953, 1.442695
        %v958 = vpow.pop %v957
        %v959 = vmul.f32 %v954, 1.442695
        %v960 = vpow.pop %v959
        %v961 = vmul.f32 %v955, 1.442695
        %v962 = vpow.pop %v961
        %v963 = vmul.f32 %v956, 1.442695
        %v964 = vpow.pop %v963
        %v965 = vadd.f32 %v958, %v960
        %v966 = vadd.f32 %v965, %v962
        %v967 = vadd.f32 %v966, %v964
        %968 = vadd.xlane.f32.xlu0 %v967
        %v969 = vpop.xlane.xlu0 %968
        %v970 = vrcp.pop %v969
        %v971 = vmul.f32 %v958, %v970
        %v972 = vmul.f32 %v960, %v970
        %v973 = vmul.f32 %v962, %v970
        %v974 = vmul.f32 %v964, %v970
        %975 = vst.msk [vmem:[%s362] sm:$0xff] %vm648, %v971
        %977 = vrot.lane.b32.xlu0 %v972, 64
        %v978 = vpop.permute.xlu0 %977
        %vm980 = vcmask 1048064
        %981 = vst.msk [vmem:[%s362] sm:$0xff] %vm980, %v978
        %982 = vst.msk [vmem:[%s362 + $0x8] sm:$0xff] %vm648, %v973
        %984 = vrot.lane.b32.xlu0 %v974, 64
        %v985 = vpop.permute.xlu0 %984
        %987 = vst.msk [vmem:[%s362 + $0x8] sm:$0xff] %vm980, %v985
        %s988 = sand.u32 %s172, 1
        %s989 = scalar_lea.sflag [#allocation5], %s988
        %s990 = sand.u32 %s172, 1
        %s991 = smul.addr %s990, 16
        %s992 = scalar_lea.vmem [#allocation14], %s991
        // Predicated region
        $region69: #{tpu_custom_call.1} parent=43 // pred_check
          %p993 = pneg %p182
        $region70: #{tpu_custom_call.1} parent=43 // pred_check_branch
          %995 = sbr.rel (%p993) target = $region72
        $region71: #{tpu_custom_call.1} parent=43 // pred_region
          %s997 = ssub.s32 256, 256
          %998 = vsyncadd %s989, %s997
          %s999 = smul.addr %s28, 2
          %s1000 = smul.addr %s999, 128
          %s1001 = scalar_lea.hbm %s6, %s1000
          %s1003 = sshll.u32 %s992, 4
          %s1004 = int_to_ptr.vmem [resolvable:$true] %s1003
          %1006 = dma.vmem_to_hbm [thread:$0]  %s1004, 256, %s1001, %s989
        $region72: #{tpu_custom_call.1} parent=43 // pred_fallthru
          _
      $region44: #{tpu_custom_call.1} parent=5 // pred_fallthru
        _
      %p1007 = scmp.le.s32.totalorder 2, %s23
      // Predicated region
      $region73: #{tpu_custom_call.1} parent=5 // pred_check
        %p1008 = pneg %p1007
      $region74: #{tpu_custom_call.1} parent=5 // pred_check_branch
        %1010 = sbr.rel (%p1008) target = $region76
      $region75: #{tpu_custom_call.1} parent=5 // pred_region
        %s1011 = ssub.s32 %s23, 2
        // Predicated region
        $region77: #{tpu_custom_call.1} parent=75 // pred_check
          %p1012 = pneg %p188
        $region78: #{tpu_custom_call.1} parent=75 // pred_check_branch
          %1014 = sbr.rel (%p1012) target = $region80
        $region79: #{tpu_custom_call.1} parent=75 // pred_region
          %s1015 = sand.u32 %s173, 1
          %s1016 = scalar_lea.sflag [#allocation5], %s1015
          %s1017 = sand.u32 %s173, 1
          %s1018 = smul.addr %s1017, 16
          %s1019 = scalar_lea.vmem [#allocation14], %s1018
          %1020 = dma.done %s1016, 256
        $region80: #{tpu_custom_call.1} parent=75 // pred_fallthru
          _
      $region76: #{tpu_custom_call.1} parent=5 // pred_fallthru
        _
    $region6: #{tpu_custom_call.1} parent=1 // loop_footer
      %s27 = sadd.s32 1, %s23
    $region7: #{tpu_custom_call.1} parent=1 // loop_footer_branch
      %22 = sbr.rel target = $region3
    $region8: #{tpu_custom_call.1} parent=1 // loop_exit
      _
    %1021 = vsyncpa [#allocation4], 1
    %s1022 = scalar_lea.sflag [#allocation4], 1
    %1023 = vsyncpa %s1022, 1
    %1024 = vsyncpa [#allocation7], 1
    %s1025 = scalar_lea.sflag [#allocation7], 1
    %1026 = vsyncpa %s1025, 1
    %1027 = vsyncpa [#allocation10], 1
    %1028 = vsyncpa [#allocation13], 1
    %1029 = vsyncpa [#allocation5], 1
    %s1030 = scalar_lea.sflag [#allocation5], 1
    %1031 = vsyncpa %s1030, 1

</llo_original>
